<compile_context>
chip_gen: v5e
topology: v5e:2x2
jax: 0.10.0
libtpu: 0.0.40
codegen_flags: <defaults>
</compile_context>

<pallas_src>
import jax
import jax.numpy as jnp
from jax.experimental import pallas as pl
from jax.experimental.pallas import tpu as pltpu


# ----------------------------------------------------------------------------
# Kernel 1: per-node projections (attention halves + fc_V), O(N*D).
# ----------------------------------------------------------------------------
def _proj_kernel(q_ref, watt_ref, wv_ref, bv_ref, s_ref, v_ref):
    f32 = jnp.float32
    q = q_ref[...].astype(f32)                                   # [TR, D]
    # fused attention projection: column 0 = src half, column 1 = dst half
    s_ref[...] = jnp.dot(q, watt_ref[...], preferred_element_type=f32)
    v_ref[...] = (jnp.dot(q, wv_ref[...], preferred_element_type=f32)
                  + bv_ref[...])


# ----------------------------------------------------------------------------
# Kernel 2: tiled attention + aggregation, O(N^2).
#   grid = (dst tiles [parallel], src tiles [arbitrary / reduction axis last])
# ----------------------------------------------------------------------------
def _gat_attn_kernel(adj_ref, sdst_ref, ssrc_ref, qsrc_ref, vsrc_ref,
                     qdst_ref, wu_ref, qnew_ref, ov_ref,
                     accd_ref, acck_ref, accv_ref):
    f32 = jnp.float32
    j = pl.program_id(1)

    @pl.when(j == 0)
    def _init():
        accd_ref[...] = jnp.zeros(accd_ref.shape, f32)
        acck_ref[...] = jnp.zeros(acck_ref.shape, f32)
        accv_ref[...] = jnp.zeros(accv_ref.shape, f32)

    # Edge score shared by both edge types (only the mask differs).
    e = jax.nn.sigmoid(sdst_ref[...] + ssrc_ref[...])            # [TD, TS]
    # Invariant: e in (0,1) => exp(e) in (1, e); single-pass (un-shifted)
    # softmax accumulation is numerically safe, no running max carried.
    ew = jnp.exp(e)

    q_src = qsrc_ref[...].astype(f32)                            # [TS, D]
    v_src = vsrc_ref[...]                                        # [TS, O]

    for t in range(2):                                           # 2 edge types, static unroll
        ex = jnp.where(adj_ref[t] != 0, ew, 0.0)                 # [TD, TS]
        accd_ref[t] += jnp.sum(ex, axis=-1, keepdims=True)       # softmax denom
        acck_ref[t] += jnp.dot(ex, q_src, preferred_element_type=f32)
        accv_ref[t] += jnp.dot(ex, v_src, preferred_element_type=f32)

    @pl.when(j == pl.num_programs(1) - 1)
    def _finalize():
        q_dst = qdst_ref[...].astype(f32)                        # [TD, D]
        x_acc = jnp.zeros(q_dst.shape, f32)
        ov_acc = jnp.zeros(ov_ref.shape, f32)
        for t in range(2):
            d = accd_ref[t]                                      # [TD, 1]
            has_in = d > 0.0
            inv = pl.reciprocal(jnp.where(has_in, d, 1.0), approx=False)
            # Rows without in-edges have exactly-zero accumulators, so only the
            # q_dst term needs the has_in gate; a@v needs no gate at all.
            x_acc = x_acc + jnp.where(has_in, q_dst + acck_ref[t] * inv, 0.0)
            ov_acc = ov_acc + accv_ref[t] * inv
        # Single fc_upd matmul hoisted out of the edge-type loop (fc_upd is linear).
        qnew_ref[...] = jnp.dot(x_acc, wu_ref[...],
                                preferred_element_type=f32).astype(qnew_ref.dtype)
        ov_ref[...] = ov_acc.astype(ov_ref.dtype)


def _pick_tile(n, pref):
    return pref if (n >= pref and n % pref == 0) else n


def gat_layer_pallas(q, adj, w_att, w_upd, w_v, b_v,
                     *, tile_dst=128, tile_src=128):
    """q: [N,D] f32; adj: [2,N,N] {0,1}; w_att: [1,2D]; w_upd: [O,D];
    w_v: [O,D]; b_v: [O].  Returns (q_new [N,O], OV [N,O])."""
    N, D = q.shape
    O = w_upd.shape[0]
    adj = adj.astype(jnp.int8)               # adjacency streamed as int8 (4x less HBM)

    # Pre-transposed weights: kernels only do row-major x @ W matmuls.
    watt2 = w_att.reshape(2, D).T            # [D, 2]  (col0 = src half, col1 = dst half)
    wv_t = w_v.T                             # [D, O]
    wu_t = w_upd.T                           # [D, O]
    bv = b_v.reshape(1, O)                   # [1, O]

    # ---- prologue: per-node projections, tiled over rows ----
    tr = _pick_tile(N, tile_dst)
    s2, v = pl.pallas_call(
        _proj_kernel,
        out_shape=(jax.ShapeDtypeStruct((N, 2), jnp.float32),
                   jax.ShapeDtypeStruct((N, O), jnp.float32)),
        grid_spec=pltpu.PrefetchScalarGridSpec(
            num_scalar_prefetch=0,
            grid=(N // tr,),
            in_specs=[pl.BlockSpec((tr, D), lambda i: (i, 0)),
                      pl.BlockSpec((D, 2), lambda i: (0, 0)),
                      pl.BlockSpec((D, O), lambda i: (0, 0)),
                      pl.BlockSpec((1, O), lambda i: (0, 0))],
            out_specs=(pl.BlockSpec((tr, 2), lambda i: (i, 0)),
                       pl.BlockSpec((tr, O), lambda i: (i, 0)))),
        compiler_params=pltpu.CompilerParams(
            dimension_semantics=("parallel",)),
    )(q, watt2, wv_t, bv)

    s_dst = s2[:, 1:2]                       # [N, 1]
    s_src_t = s2[:, 0:1].T                   # [1, N]  lane-major for broadcast add

    # ---- main tiled attention kernel ----
    td = _pick_tile(N, tile_dst)
    ts = _pick_tile(N, tile_src)
    grid = (N // td, N // ts)

    # Rough per-step VMEM budget: double-buffered inputs/outputs + scratch
    # (with lane padding), 4x margin, clamped inside v7x's 64 MiB physical VMEM.
    vmem_est = 2 * (2 * td * ts                        # adj int8 tile
                    + td * 128 * 4 + 8 * ts * 4        # s_dst / s_src^T (padded)
                    + ts * D * 4 + ts * O * 4          # q_src / v_src
                    + td * D * 4 + D * O * 4)          # q_dst / w_upd^T
    vmem_est += 2 * 2 * td * O * 4                     # the two outputs
    vmem_est += (2 * td * 128 + 2 * td * D + 2 * td * O) * 4   # scratch accumulators
    vmem_limit = int(min(max(4 * vmem_est, 16 * 1024 * 1024), 60 * 1024 * 1024))

    q_new, ov = pl.pallas_call(
        _gat_attn_kernel,
        out_shape=(jax.ShapeDtypeStruct((N, O), jnp.float32),
                   jax.ShapeDtypeStruct((N, O), jnp.float32)),
        grid_spec=pltpu.PrefetchScalarGridSpec(
            num_scalar_prefetch=0,
            grid=grid,
            in_specs=[pl.BlockSpec((2, td, ts), lambda i, j: (0, i, j)),  # adj (int8)
                      pl.BlockSpec((td, 1), lambda i, j: (i, 0)),         # s_dst
                      pl.BlockSpec((1, ts), lambda i, j: (0, j)),         # s_src^T
                      pl.BlockSpec((ts, D), lambda i, j: (j, 0)),         # q (src view)
                      pl.BlockSpec((ts, O), lambda i, j: (j, 0)),         # fc_V(q) (src view)
                      pl.BlockSpec((td, D), lambda i, j: (i, 0)),         # q (dst view)
                      pl.BlockSpec((D, O), lambda i, j: (0, 0))],         # w_upd^T
            out_specs=(pl.BlockSpec((td, O), lambda i, j: (i, 0)),
                       pl.BlockSpec((td, O), lambda i, j: (i, 0))),
            scratch_shapes=[pltpu.VMEM((2, td, 1), jnp.float32),   # softmax denoms
                            pltpu.VMEM((2, td, D), jnp.float32),   # ex @ q accumulators
                            pltpu.VMEM((2, td, O), jnp.float32)]), # ex @ v accumulators
        compiler_params=pltpu.CompilerParams(
            dimension_semantics=("parallel", "arbitrary"),
            vmem_limit_bytes=vmem_limit),
    )(adj, s_dst, s_src_t, q, v, q, wu_t)
    return q_new, ov


def gat_layer_ref(q, adj, w_att, w_upd, w_v, b_v):
    """Plain-JAX dense reference with the classic (max-subtracted) masked softmax."""
    N, D = q.shape
    s_src = q @ w_att[:, :D].T
    s_dst = q @ w_att[:, D:].T
    v = q @ w_v.T + b_v
    e = jax.nn.sigmoid(s_dst + s_src.T)
    qnew = 0.0
    ov = 0.0
    for t in range(2):
        edge = adj[t] > 0
        maskf = edge.astype(jnp.float32)
        has_in = jnp.sum(maskf, axis=-1, keepdims=True) > 0
        logits = jnp.where(edge, e, -1e30)
        m = jnp.max(logits, axis=-1, keepdims=True)
        ex = jnp.exp(logits - m) * maskf
        denom = jnp.sum(ex, axis=-1, keepdims=True)
        a = ex / jnp.where(denom > 0, denom, 1.0)
        qnew = qnew + jnp.where(has_in, (q + a @ q) @ w_upd.T, 0.0)
        ov = ov + jnp.where(has_in, a @ v, 0.0)
    return qnew, ov


if __name__ == "__main__":
    N, IN_DIM, OUT_DIM = 256, 32, 32      # exercises a (2, 2) grid with 128-tiles

    key = jax.random.PRNGKey(0)
    k_q, k_adj, k_att, k_upd, k_v, k_bv = jax.random.split(key, 6)

    # Node features.
    q = jax.random.normal(k_q, (N, IN_DIM), dtype=jnp.float32)
    # Two edge-type dense adjacency masks adj[t, dst, src] in int8 {0,1}.
    adj = (jax.random.uniform(k_adj, (2, N, N)) < 0.2).astype(jnp.int8)
    # A few isolated rows to exercise the "no incoming edges" path.
    adj = adj.at[0, 3, :].set(0)
    adj = adj.at[1, 3, :].set(0)
    adj = adj.at[0, 17, :].set(0)

    # Synthetic parameters matching the nn.Linear shapes.
    w_att = jax.random.normal(k_att, (1, 2 * IN_DIM), dtype=jnp.float32) * 0.1
    w_upd = jax.random.normal(k_upd, (OUT_DIM, IN_DIM), dtype=jnp.float32) * 0.1
    w_v = jax.random.normal(k_v, (OUT_DIM, IN_DIM), dtype=jnp.float32) * 0.1
    b_v = jax.random.normal(k_bv, (OUT_DIM,), dtype=jnp.float32) * 0.1

    q_new, ov = gat_layer_pallas(q, adj, w_att, w_upd, w_v, b_v)
    jax.block_until_ready((q_new, ov))

    q_new_ref, ov_ref = gat_layer_ref(q, adj, w_att, w_upd, w_v, b_v)
    assert jnp.allclose(q_new, q_new_ref, atol=1e-4, rtol=1e-4)
    assert jnp.allclose(ov, ov_ref, atol=1e-4, rtol=1e-4)

    print("KERNEL_OK")
</pallas_src>

<mosaic_0001>
module attributes {stable_mosaic.version = 11 : i64} {
  func.func @_proj_kernel(%arg0: i32, %arg1: memref<128x32xf32, #tpu.memory_space<vmem>>, %arg2: memref<32x2xf32, #tpu.memory_space<vmem>>, %arg3: memref<32x32xf32, #tpu.memory_space<vmem>>, %arg4: memref<1x32xf32, #tpu.memory_space<vmem>>, %arg5: memref<128x2xf32, #tpu.memory_space<vmem>>, %arg6: memref<128x32xf32, #tpu.memory_space<vmem>>) attributes {dimension_semantics = [#tpu.dimension_semantics<parallel>], iteration_bounds = array<i64: 2>, scalar_prefetch = 0 : i64, scratch_operands = 0 : i64, tpu.core_type = #tpu.core_type<tc>, window_params = [{transform_indices = @transform_0, window_bounds = array<i64: 128, 32>}, {pipeline_mode = #tpu.pipeline_mode<synchronous>, transform_indices = @transform_1, window_bounds = array<i64: 32, 2>}, {pipeline_mode = #tpu.pipeline_mode<synchronous>, transform_indices = @transform_2, window_bounds = array<i64: 32, 32>}, {pipeline_mode = #tpu.pipeline_mode<synchronous>, transform_indices = @transform_3, window_bounds = array<i64: 1, 32>}, {transform_indices = @transform_4, window_bounds = array<i64: 128, 2>}, {transform_indices = @transform_5, window_bounds = array<i64: 128, 32>}]} {
    %c0 = arith.constant 0 : index
    %c0_0 = arith.constant 0 : index
    %0 = vector.load %arg1[%c0, %c0_0] : memref<128x32xf32, #tpu.memory_space<vmem>>, vector<128x32xf32>
    %c0_1 = arith.constant 0 : index
    %c0_2 = arith.constant 0 : index
    %1 = vector.load %arg2[%c0_1, %c0_2] : memref<32x2xf32, #tpu.memory_space<vmem>>, vector<32x2xf32>
    %cst = arith.constant dense<0.000000e+00> : vector<128x2xf32>
    %2 = tpu.matmul %0, %1, %cst {dimension_numbers = #tpu.dot_dimension_numbers<[1], [0], [0], [1], [0, 0, 1, 1], [], []>} : vector<128x32xf32>, vector<32x2xf32>, vector<128x2xf32> -> vector<128x2xf32>
    %c0_3 = arith.constant 0 : index
    %c0_4 = arith.constant 0 : index
    %3 = vector.load %arg5[%c0_3, %c0_4] : memref<128x2xf32, #tpu.memory_space<vmem>>, vector<128x2xf32>
    tpu.vector_store %arg5[%c0_3, %c0_4], %2 {strides = array<i32>} : memref<128x2xf32, #tpu.memory_space<vmem>>, vector<128x2xf32>,
    %c0_5 = arith.constant 0 : index
    %c0_6 = arith.constant 0 : index
    %4 = vector.load %arg3[%c0_5, %c0_6] : memref<32x32xf32, #tpu.memory_space<vmem>>, vector<32x32xf32>
    %cst_7 = arith.constant dense<0.000000e+00> : vector<128x32xf32>
    %5 = tpu.matmul %0, %4, %cst_7 {dimension_numbers = #tpu.dot_dimension_numbers<[1], [0], [0], [1], [0, 0, 1, 1], [], []>} : vector<128x32xf32>, vector<32x32xf32>, vector<128x32xf32> -> vector<128x32xf32>
    %c0_8 = arith.constant 0 : index
    %c0_9 = arith.constant 0 : index
    %6 = vector.load %arg4[%c0_8, %c0_9] : memref<1x32xf32, #tpu.memory_space<vmem>>, vector<1x32xf32>
    %7 = vector.broadcast %6 : vector<1x32xf32> to vector<128x32xf32>
    %8 = arith.addf %5, %7 : vector<128x32xf32>
    %c0_10 = arith.constant 0 : index
    %c0_11 = arith.constant 0 : index
    %9 = vector.load %arg6[%c0_10, %c0_11] : memref<128x32xf32, #tpu.memory_space<vmem>>, vector<128x32xf32>
    tpu.vector_store %arg6[%c0_10, %c0_11], %8 {strides = array<i32>} : memref<128x32xf32, #tpu.memory_space<vmem>>, vector<128x32xf32>,
    return
  }
  func.func @transform_0(%arg0: i32) -> (i32, i32) {
    %c0_i32 = arith.constant 0 : i32
    %c0_i32_0 = arith.constant 0 : i32
    return %arg0, %c0_i32 : i32, i32
  }
  func.func @transform_1(%arg0: i32) -> (i32, i32) {
    %c0_i32 = arith.constant 0 : i32
    %c0_i32_0 = arith.constant 0 : i32
    %c0_i32_1 = arith.constant 0 : i32
    return %c0_i32, %c0_i32_0 : i32, i32
  }
  func.func @transform_2(%arg0: i32) -> (i32, i32) {
    %c0_i32 = arith.constant 0 : i32
    %c0_i32_0 = arith.constant 0 : i32
    %c0_i32_1 = arith.constant 0 : i32
    return %c0_i32, %c0_i32_0 : i32, i32
  }
  func.func @transform_3(%arg0: i32) -> (i32, i32) {
    %c0_i32 = arith.constant 0 : i32
    %c0_i32_0 = arith.constant 0 : i32
    %c0_i32_1 = arith.constant 0 : i32
    return %c0_i32, %c0_i32_0 : i32, i32
  }
  func.func @transform_4(%arg0: i32) -> (i32, i32) {
    %c0_i32 = arith.constant 0 : i32
    %c0_i32_0 = arith.constant 0 : i32
    return %arg0, %c0_i32 : i32, i32
  }
  func.func @transform_5(%arg0: i32) -> (i32, i32) {
    %c0_i32 = arith.constant 0 : i32
    %c0_i32_0 = arith.constant 0 : i32
    return %arg0, %c0_i32 : i32, i32
  }
}

</mosaic_0001>

<llo_original>
// kernel: tpu_custom_call.1
$region0: #{tpu_custom_call.1}
  #allocation0 [shape = 'u32[]', space=smem, size = 0x4, offset = 0x4, fixed_abs, tag = 'smem constant byte address 0x4 - core index']
  #allocation1 [shape = 'u32[72,128]{1,0:T(1,128)}', space=vmem, size = 0x9000, scoped, tag = 'internal scratch']
  %s0 = inlined_call_operand.vmem [shape: f32[256,32], index: 0, kind: input, shape index: {}]
  %s1 = inlined_call_operand.vmem [shape: f32[32,2], index: 1, kind: input, shape index: {}]
  %s2 = inlined_call_operand.vmem [shape: f32[32,32], index: 2, kind: input, shape index: {}]
  %s3 = inlined_call_operand.vmem [shape: f32[1,32], index: 3, kind: input, shape index: {}]
  %s4 = inlined_call_operand.vmem [shape: f32[256,2], index: 4, kind: output, shape index: {0}]
  %s5 = inlined_call_operand.vmem [shape: f32[256,32], index: 5, kind: output, shape index: {1}]
  %6 = xla_tuple %s4, %s5
  %s7 = sld [smem:[#allocation0]]
  $region57: #{tpu_custom_call.1} parent=0
    _
  %s9 = ssub.s32 1, %s7
  %s10 = scalar_select 0, %s9, %s7
  loop: start=0, step=1, limit=4
  $region2: #{tpu_custom_call.1} parent=0 // loop_pre_header
    _
  $region3: #{tpu_custom_call.1} parent=0 // loop_header
    %s12 = sphi 0, %s16
    %p13 = scmp.ge.s32.totalorder %s12, 4
    %s22 = sphi 0, %s24
    %s25 = sphi 0, %s22
    %s26 = sphi 0, %s25
    %s42 = sphi 0, %s26
    %s46 = sphi 0, %s46
    %s48 = sphi 0, %s46
    %s49 = sphi 0, %s48
    %s63 = sphi 0, %s49
    %s67 = sphi 0, %s67
    %s69 = sphi 0, %s67
    %s70 = sphi 0, %s69
    %s84 = sphi 0, %s70
    %s88 = sphi 0, %s88
    %s90 = sphi 0, %s88
    %s91 = sphi 0, %s90
    %s105 = sphi 0, %s91
    %s111 = sphi 0, %s113
    %s114 = sphi 0, %s111
    %s115 = sphi 0, %s114
    %s131 = sphi 0, %s115
    %s137 = sphi 0, %s139
    %s140 = sphi 0, %s137
    %s141 = sphi 0, %s140
    %s157 = sphi 0, %s141
  $region4: #{tpu_custom_call.1} parent=0 // loop_header_branch
    %15 = sbr.rel (%p13) target = $region8
  $region5: #{tpu_custom_call.1} parent=0 // loop_body
    %s17 = ssub.s32 %s12, 1
    %s18 = ssub.s32 %s12, 2
    %s19 = sadd.s32 %s12, 1
    %s20 = ssub.s32 %s12, %s19
    %p21 = scmp.eq.s32.totalorder %s20, 0
    %s23 = sadd.s32 %s22, 1
    %s24 = scalar_select %p21, %s22, %s23
    %p27 = pneg %p21
    %p28 = scmp.eq.s32.totalorder %s12, 1
    %p29 = por %p27, %p28
    %p30 = scmp.ne.s32.totalorder %s22, %s25
    %p31 = scmp.eq.s32.totalorder %s12, 0
    %p32 = por %p30, %p31
    %p33 = scmp.ne.s32.totalorder %s22, %s25
    %p34 = scmp.eq.s32.totalorder %s17, 1
    %p35 = por %p33, %p34
    %p36 = scmp.ne.s32.totalorder %s25, %s26
    %p37 = scmp.eq.s32.totalorder %s17, 0
    %p38 = por %p36, %p37
    %p39 = scmp.ne.s32.totalorder %s25, %s26
    %p40 = scmp.eq.s32.totalorder %s18, 1
    %p41 = por %p39, %p40
    %p43 = scmp.ne.s32.totalorder %s26, %s42
    %p44 = scmp.eq.s32.totalorder %s18, 0
    %p45 = por %p43, %p44
    %s47 = sadd.s32 %s46, 1
    %p50 = scmp.eq.s32.totalorder %s12, 1
    %p51 = scmp.ne.s32.totalorder %s46, %s48
    %p52 = scmp.eq.s32.totalorder %s12, 0
    %p53 = por %p51, %p52
    %p54 = scmp.ne.s32.totalorder %s46, %s48
    %p55 = scmp.eq.s32.totalorder %s17, 1
    %p56 = por %p54, %p55
    %p57 = scmp.ne.s32.totalorder %s48, %s49
    %p58 = scmp.eq.s32.totalorder %s17, 0
    %p59 = por %p57, %p58
    %p60 = scmp.ne.s32.totalorder %s48, %s49
    %p61 = scmp.eq.s32.totalorder %s18, 1
    %p62 = por %p60, %p61
    %p64 = scmp.ne.s32.totalorder %s49, %s63
    %p65 = scmp.eq.s32.totalorder %s18, 0
    %p66 = por %p64, %p65
    %s68 = sadd.s32 %s67, 1
    %p71 = scmp.eq.s32.totalorder %s12, 1
    %p72 = scmp.ne.s32.totalorder %s67, %s69
    %p73 = scmp.eq.s32.totalorder %s12, 0
    %p74 = por %p72, %p73
    %p75 = scmp.ne.s32.totalorder %s67, %s69
    %p76 = scmp.eq.s32.totalorder %s17, 1
    %p77 = por %p75, %p76
    %p78 = scmp.ne.s32.totalorder %s69, %s70
    %p79 = scmp.eq.s32.totalorder %s17, 0
    %p80 = por %p78, %p79
    %p81 = scmp.ne.s32.totalorder %s69, %s70
    %p82 = scmp.eq.s32.totalorder %s18, 1
    %p83 = por %p81, %p82
    %p85 = scmp.ne.s32.totalorder %s70, %s84
    %p86 = scmp.eq.s32.totalorder %s18, 0
    %p87 = por %p85, %p86
    %s89 = sadd.s32 %s88, 1
    %p92 = scmp.eq.s32.totalorder %s12, 1
    %p93 = scmp.ne.s32.totalorder %s88, %s90
    %p94 = scmp.eq.s32.totalorder %s12, 0
    %p95 = por %p93, %p94
    %p96 = scmp.ne.s32.totalorder %s88, %s90
    %p97 = scmp.eq.s32.totalorder %s17, 1
    %p98 = por %p96, %p97
    %p99 = scmp.ne.s32.totalorder %s90, %s91
    %p100 = scmp.eq.s32.totalorder %s17, 0
    %p101 = por %p99, %p100
    %p102 = scmp.ne.s32.totalorder %s90, %s91
    %p103 = scmp.eq.s32.totalorder %s18, 1
    %p104 = por %p102, %p103
    %p106 = scmp.ne.s32.totalorder %s91, %s105
    %p107 = scmp.eq.s32.totalorder %s18, 0
    %p108 = por %p106, %p107
    %s109 = ssub.s32 %s12, %s19
    %p110 = scmp.eq.s32.totalorder %s109, 0
    %s112 = sadd.s32 %s111, 1
    %s113 = scalar_select %p110, %s111, %s112
    %p116 = pneg %p110
    %p117 = scmp.eq.s32.totalorder %s12, 1
    %p118 = por %p116, %p117
    %p119 = scmp.ne.s32.totalorder %s111, %s114
    %p120 = scmp.eq.s32.totalorder %s12, 0
    %p121 = por %p119, %p120
    %p122 = scmp.ne.s32.totalorder %s111, %s114
    %p123 = scmp.eq.s32.totalorder %s17, 1
    %p124 = por %p122, %p123
    %p125 = scmp.ne.s32.totalorder %s114, %s115
    %p126 = scmp.eq.s32.totalorder %s17, 0
    %p127 = por %p125, %p126
    %p128 = scmp.ne.s32.totalorder %s114, %s115
    %p129 = scmp.eq.s32.totalorder %s18, 1
    %p130 = por %p128, %p129
    %p132 = scmp.ne.s32.totalorder %s115, %s131
    %p133 = scmp.eq.s32.totalorder %s18, 0
    %p134 = por %p132, %p133
    %s135 = ssub.s32 %s12, %s19
    %p136 = scmp.eq.s32.totalorder %s135, 0
    %s138 = sadd.s32 %s137, 1
    %s139 = scalar_select %p136, %s137, %s138
    %p142 = pneg %p136
    %p143 = scmp.eq.s32.totalorder %s12, 1
    %p144 = por %p142, %p143
    %p145 = scmp.ne.s32.totalorder %s137, %s140
    %p146 = scmp.eq.s32.totalorder %s12, 0
    %p147 = por %p145, %p146
    %p148 = scmp.ne.s32.totalorder %s137, %s140
    %p149 = scmp.eq.s32.totalorder %s17, 1
    %p150 = por %p148, %p149
    %p151 = scmp.ne.s32.totalorder %s140, %s141
    %p152 = scmp.eq.s32.totalorder %s17, 0
    %p153 = por %p151, %p152
    %p154 = scmp.ne.s32.totalorder %s140, %s141
    %p155 = scmp.eq.s32.totalorder %s18, 1
    %p156 = por %p154, %p155
    %p158 = scmp.ne.s32.totalorder %s141, %s157
    %p159 = scmp.eq.s32.totalorder %s18, 0
    %p160 = por %p158, %p159
    %p161 = scmp.le.s32.totalorder 1, %s12
    %p162 = scmp.lt.s32.totalorder %s12, 3
    %p163 = pnand %p161, %p162
    %p164 = pneg %p163
    // Predicated region
    $region9: #{tpu_custom_call.1} parent=5 // pred_check
      _
    $region10: #{tpu_custom_call.1} parent=5 // pred_check_branch
      %166 = sbr.rel (%p163) target = $region12
    $region11: #{tpu_custom_call.1} parent=5 // pred_region
      %s167 = ssub.s32 %s12, 1
      // Predicated region
      $region13: #{tpu_custom_call.1} parent=11 // pred_check
        %p168 = pneg %p59
      $region14: #{tpu_custom_call.1} parent=11 // pred_check_branch
        %170 = sbr.rel (%p168) target = $region16
      $region15: #{tpu_custom_call.1} parent=11 // pred_region
        _
      $region16: #{tpu_custom_call.1} parent=11 // pred_fallthru
        _
      // Predicated region
      $region17: #{tpu_custom_call.1} parent=11 // pred_check
        %p171 = pneg %p80
      $region18: #{tpu_custom_call.1} parent=11 // pred_check_branch
        %173 = sbr.rel (%p171) target = $region20
      $region19: #{tpu_custom_call.1} parent=11 // pred_region
        _
      $region20: #{tpu_custom_call.1} parent=11 // pred_fallthru
        _
      // Predicated region
      $region21: #{tpu_custom_call.1} parent=11 // pred_check
        %p174 = pneg %p101
      $region22: #{tpu_custom_call.1} parent=11 // pred_check_branch
        %176 = sbr.rel (%p174) target = $region24
      $region23: #{tpu_custom_call.1} parent=11 // pred_region
        _
      $region24: #{tpu_custom_call.1} parent=11 // pred_fallthru
        _
    $region12: #{tpu_custom_call.1} parent=5 // pred_fallthru
      _
    %p177 = scmp.lt.s32.totalorder %s12, 2
    // Predicated region
    $region25: #{tpu_custom_call.1} parent=5 // pred_check
      %p178 = pneg %p177
    $region26: #{tpu_custom_call.1} parent=5 // pred_check_branch
      %180 = sbr.rel (%p178) target = $region28
    $region27: #{tpu_custom_call.1} parent=5 // pred_region
      // Predicated region
      $region29: #{tpu_custom_call.1} parent=27 // pred_check
        %p181 = pneg %p32
      $region30: #{tpu_custom_call.1} parent=27 // pred_check_branch
        %183 = sbr.rel (%p181) target = $region32
      $region31: #{tpu_custom_call.1} parent=27 // pred_region
        %s184 = smul.u32 16, %s12
        %p185 = scmp.lt.s32.totalorder %s184, 31
        %s186 = scalar_select %p185, %s184, 31
        %s187 = smul.addr %s186, 8
        %s188 = scalar_lea.vmem %s0, %s187
        %s189 = smul.u32 16, %s12
      $region32: #{tpu_custom_call.1} parent=27 // pred_fallthru
        _
    $region28: #{tpu_custom_call.1} parent=5 // pred_fallthru
      _
    %p190 = scmp.le.s32.totalorder 1, %s12
    %p191 = scmp.lt.s32.totalorder %s12, 3
    %p192 = pnand %p190, %p191
    %p193 = pneg %p192
    // Predicated region
    $region33: #{tpu_custom_call.1} parent=5 // pred_check
      _
    $region34: #{tpu_custom_call.1} parent=5 // pred_check_branch
      %195 = sbr.rel (%p192) target = $region36
    $region35: #{tpu_custom_call.1} parent=5 // pred_region
      %s196 = ssub.s32 %s12, 1
      %s197 = smul.u32 16, %s17
      %p198 = scmp.lt.s32.totalorder %s197, 31
      %s199 = scalar_select %p198, %s197, 31
      %s200 = smul.addr %s199, 8
      %s201 = scalar_lea.vmem %s0, %s200
      %p202 = pneg %p38
      %p203 = pneg %p35
      %p204 = pneg %p59
      %p205 = pneg %p56
      %p206 = pneg %p80
      %p207 = pneg %p77
      %p208 = pneg %p101
      %p209 = pneg %p98
      %p210 = pneg %p127
      %p211 = pneg %p124
      %s212 = smul.u32 16, %s17
      %p213 = scmp.lt.s32.totalorder %s212, 31
      %s214 = scalar_select %p213, %s212, 31
      %s215 = smul.addr %s214, 8
      %s216 = scalar_lea.vmem %s4, %s215
      %p217 = pneg %p153
      %p218 = pneg %p150
      %s219 = smul.u32 16, %s17
      %p220 = scmp.lt.s32.totalorder %s219, 31
      %s221 = scalar_select %p220, %s219, 31
      %s222 = smul.addr %s221, 8
      %s223 = scalar_lea.vmem %s5, %s222
      %s224 = smul.u32 16, %s17
      %p225 = scmp.lt.s32.totalorder %s224, 31
      %s226 = scalar_select %p225, %s224, 31
      %s227 = smul.addr %s226, 8
      %s228 = scalar_lea.vmem %s0, %s227
      %s229 = smul.u32 16, %s17
      %s230 = smul.u32 16, %s17
      %p231 = scmp.lt.s32.totalorder %s230, 31
      %s232 = scalar_select %p231, %s230, 31
      %s233 = smul.addr %s232, 8
      %s234 = scalar_lea.vmem %s4, %s233
      %s235 = smul.u32 16, %s17
      %s236 = smul.u32 16, %s17
      %p237 = scmp.lt.s32.totalorder %s236, 31
      %s238 = scalar_select %p237, %s236, 31
      %s239 = smul.addr %s238, 8
      %s240 = scalar_lea.vmem %s5, %s239
      %s241 = smul.u32 16, %s17
      %v242 = vld [vmem:[%s228] sm:$0xff]
      %v243 = vld [vmem:[%s228 + $0x8] sm:$0xff]
      %v244 = vld [vmem:[%s228 + $0x10] sm:$0xff]
      %v245 = vld [vmem:[%s228 + $0x18] sm:$0xff]
      %v246 = vld [vmem:[%s228 + $0x20] sm:$0xff]
      %v247 = vld [vmem:[%s228 + $0x28] sm:$0xff]
      %v248 = vld [vmem:[%s228 + $0x30] sm:$0xff]
      %v249 = vld [vmem:[%s228 + $0x38] sm:$0xff]
      %v250 = vld [vmem:[%s228 + $0x40] sm:$0xff]
      %v251 = vld [vmem:[%s228 + $0x48] sm:$0xff]
      %v252 = vld [vmem:[%s228 + $0x50] sm:$0xff]
      %v253 = vld [vmem:[%s228 + $0x58] sm:$0xff]
      %v254 = vld [vmem:[%s228 + $0x60] sm:$0xff]
      %v255 = vld [vmem:[%s228 + $0x68] sm:$0xff]
      %v256 = vld [vmem:[%s228 + $0x70] sm:$0xff]
      %v257 = vld [vmem:[%s228 + $0x78] sm:$0xff]
      %v258 = vld [vmem:[%s1] sm:$0xff]
      %v259 = vld [vmem:[%s1 + $0x8] sm:$0xff]
      %v260 = vld [vmem:[%s1 + $0x10] sm:$0xff]
      %v261 = vld [vmem:[%s1 + $0x18] sm:$0xff]
      %vm262 = vcmask 261120
      %v264 = vsel %vm262, %v242, 0
      %v267 = vsel %vm262, %v243, 0
      %v270 = vsel %vm262, %v244, 0
      %v273 = vsel %vm262, %v245, 0
      %v276 = vsel %vm262, %v246, 0
      %v279 = vsel %vm262, %v247, 0
      %v282 = vsel %vm262, %v248, 0
      %v285 = vsel %vm262, %v249, 0
      %v288 = vsel %vm262, %v250, 0
      %v291 = vsel %vm262, %v251, 0
      %v294 = vsel %vm262, %v252, 0
      %v297 = vsel %vm262, %v253, 0
      %v300 = vsel %vm262, %v254, 0
      %v303 = vsel %vm262, %v255, 0
      %v306 = vsel %vm262, %v256, 0
      %v309 = vsel %vm262, %v257, 0
      %311 = vmatpush.msra.mxu0 0.0
      %312 = vmatpush.msra.mxu0 0.0
      %313 = vmatpush.msra.mxu0 0.0
      %314 = vmatpush.msra.mxu0 0.0
      %315 = vmatpush.msra.mxu0 0.0
      %316 = vmatpush.msra.mxu0 0.0
      %317 = vmatpush.msra.mxu0 0.0
      %318 = vmatpush.msra.mxu0 0.0
      %319 = vmatpush.msra.mxu0 0.0
      %320 = vmatpush.msra.mxu0 0.0
      %321 = vmatpush.msra.mxu0 0.0
      %322 = vmatpush.msra.mxu0 0.0
      %323 = vmatpush.msra.mxu0 %v261
      %324 = vmatpush.msra.mxu0 %v260
      %325 = vmatpush.msra.mxu0 %v259
      %326 = vmatpush.msra.mxu0 %v258
      %327 = vmatmul.f32.gmra.mxu0 %v264
      %v328 = vpop.f32.mrf.mxu0
      %v329 = vadd.f32 0.0, %v328
      %330 = vmatmul.f32.gmra.mxu0 %v267
      %v331 = vpop.f32.mrf.mxu0
      %v332 = vadd.f32 0.0, %v331
      %333 = vmatmul.f32.gmra.mxu0 %v270
      %v334 = vpop.f32.mrf.mxu0
      %v335 = vadd.f32 0.0, %v334
      %336 = vmatmul.f32.gmra.mxu0 %v273
      %v337 = vpop.f32.mrf.mxu0
      %v338 = vadd.f32 0.0, %v337
      %339 = vmatmul.f32.gmra.mxu0 %v276
      %v340 = vpop.f32.mrf.mxu0
      %v341 = vadd.f32 0.0, %v340
      %342 = vmatmul.f32.gmra.mxu0 %v279
      %v343 = vpop.f32.mrf.mxu0
      %v344 = vadd.f32 0.0, %v343
      %345 = vmatmul.f32.gmra.mxu0 %v282
      %v346 = vpop.f32.mrf.mxu0
      %v347 = vadd.f32 0.0, %v346
      %348 = vmatmul.f32.gmra.mxu0 %v285
      %v349 = vpop.f32.mrf.mxu0
      %v350 = vadd.f32 0.0, %v349
      %351 = vmatmul.f32.gmra.mxu0 %v288
      %v352 = vpop.f32.mrf.mxu0
      %v353 = vadd.f32 0.0, %v352
      %354 = vmatmul.f32.gmra.mxu0 %v291
      %v355 = vpop.f32.mrf.mxu0
      %v356 = vadd.f32 0.0, %v355
      %357 = vmatmul.f32.gmra.mxu0 %v294
      %v358 = vpop.f32.mrf.mxu0
      %v359 = vadd.f32 0.0, %v358
      %360 = vmatmul.f32.gmra.mxu0 %v297
      %v361 = vpop.f32.mrf.mxu0
      %v362 = vadd.f32 0.0, %v361
      %363 = vmatmul.f32.gmra.mxu0 %v300
      %v364 = vpop.f32.mrf.mxu0
      %v365 = vadd.f32 0.0, %v364
      %366 = vmatmul.f32.gmra.mxu0 %v303
      %v367 = vpop.f32.mrf.mxu0
      %v368 = vadd.f32 0.0, %v367
      %369 = vmatmul.f32.gmra.mxu0 %v306
      %v370 = vpop.f32.mrf.mxu0
      %v371 = vadd.f32 0.0, %v370
      %372 = vmatmul.f32.gmra.mxu0 %v309
      %v373 = vpop.f32.mrf.mxu0
      %v374 = vadd.f32 0.0, %v373
      %375 = vdwg.mxu0
      %vm376 = vcmask 15360
      %377 = vst.msk [vmem:[%s234] sm:$0xff] %vm376, %v329
      %378 = vst.msk [vmem:[%s234 + $0x8] sm:$0xff] %vm376, %v332
      %379 = vst.msk [vmem:[%s234 + $0x10] sm:$0xff] %vm376, %v335
      %380 = vst.msk [vmem:[%s234 + $0x18] sm:$0xff] %vm376, %v338
      %381 = vst.msk [vmem:[%s234 + $0x20] sm:$0xff] %vm376, %v341
      %382 = vst.msk [vmem:[%s234 + $0x28] sm:$0xff] %vm376, %v344
      %383 = vst.msk [vmem:[%s234 + $0x30] sm:$0xff] %vm376, %v347
      %384 = vst.msk [vmem:[%s234 + $0x38] sm:$0xff] %vm376, %v350
      %385 = vst.msk [vmem:[%s234 + $0x40] sm:$0xff] %vm376, %v353
      %386 = vst.msk [vmem:[%s234 + $0x48] sm:$0xff] %vm376, %v356
      %387 = vst.msk [vmem:[%s234 + $0x50] sm:$0xff] %vm376, %v359
      %388 = vst.msk [vmem:[%s234 + $0x58] sm:$0xff] %vm376, %v362
      %389 = vst.msk [vmem:[%s234 + $0x60] sm:$0xff] %vm376, %v365
      %390 = vst.msk [vmem:[%s234 + $0x68] sm:$0xff] %vm376, %v368
      %391 = vst.msk [vmem:[%s234 + $0x70] sm:$0xff] %vm376, %v371
      %392 = vst.msk [vmem:[%s234 + $0x78] sm:$0xff] %vm376, %v374
      %v393 = vld [vmem:[%s2] sm:$0xff]
      %v394 = vld [vmem:[%s2 + $0x8] sm:$0xff]
      %v395 = vld [vmem:[%s2 + $0x10] sm:$0xff]
      %v396 = vld [vmem:[%s2 + $0x18] sm:$0xff]
      %v397 = vld [vmem:[%s3] sm:$0x1]
      %v399 = vperm.slane %v397, 0
      %401 = vmatpush.msra.mxu0 0.0
      %402 = vmatpush.msra.mxu0 0.0
      %403 = vmatpush.msra.mxu0 0.0
      %404 = vmatpush.msra.mxu0 0.0
      %405 = vmatpush.msra.mxu0 0.0
      %406 = vmatpush.msra.mxu0 0.0
      %407 = vmatpush.msra.mxu0 0.0
      %408 = vmatpush.msra.mxu0 0.0
      %409 = vmatpush.msra.mxu0 0.0
      %410 = vmatpush.msra.mxu0 0.0
      %411 = vmatpush.msra.mxu0 0.0
      %412 = vmatpush.msra.mxu0 0.0
      %413 = vmatpush.msra.mxu0 %v396
      %414 = vmatpush.msra.mxu0 %v395
      %415 = vmatpush.msra.mxu0 %v394
      %416 = vmatpush.msra.mxu0 %v393
      %417 = vmatmul.f32.gmra.mxu0 %v264
      %v418 = vpop.f32.mrf.mxu0
      %v419 = vadd.f32 %v399, %v418
      %420 = vmatmul.f32.gmra.mxu0 %v267
      %v421 = vpop.f32.mrf.mxu0
      %v422 = vadd.f32 %v399, %v421
      %423 = vmatmul.f32.gmra.mxu0 %v270
      %v424 = vpop.f32.mrf.mxu0
      %v425 = vadd.f32 %v399, %v424
      %426 = vmatmul.f32.gmra.mxu0 %v273
      %v427 = vpop.f32.mrf.mxu0
      %v428 = vadd.f32 %v399, %v427
      %429 = vmatmul.f32.gmra.mxu0 %v276
      %v430 = vpop.f32.mrf.mxu0
      %v431 = vadd.f32 %v399, %v430
      %432 = vmatmul.f32.gmra.mxu0 %v279
      %v433 = vpop.f32.mrf.mxu0
      %v434 = vadd.f32 %v399, %v433
      %435 = vmatmul.f32.gmra.mxu0 %v282
      %v436 = vpop.f32.mrf.mxu0
      %v437 = vadd.f32 %v399, %v436
      %438 = vmatmul.f32.gmra.mxu0 %v285
      %v439 = vpop.f32.mrf.mxu0
      %v440 = vadd.f32 %v399, %v439
      %441 = vmatmul.f32.gmra.mxu0 %v288
      %v442 = vpop.f32.mrf.mxu0
      %v443 = vadd.f32 %v399, %v442
      %444 = vmatmul.f32.gmra.mxu0 %v291
      %v445 = vpop.f32.mrf.mxu0
      %v446 = vadd.f32 %v399, %v445
      %447 = vmatmul.f32.gmra.mxu0 %v294
      %v448 = vpop.f32.mrf.mxu0
      %v449 = vadd.f32 %v399, %v448
      %450 = vmatmul.f32.gmra.mxu0 %v297
      %v451 = vpop.f32.mrf.mxu0
      %v452 = vadd.f32 %v399, %v451
      %453 = vmatmul.f32.gmra.mxu0 %v300
      %v454 = vpop.f32.mrf.mxu0
      %v455 = vadd.f32 %v399, %v454
      %456 = vmatmul.f32.gmra.mxu0 %v303
      %v457 = vpop.f32.mrf.mxu0
      %v458 = vadd.f32 %v399, %v457
      %459 = vmatmul.f32.gmra.mxu0 %v306
      %v460 = vpop.f32.mrf.mxu0
      %v461 = vadd.f32 %v399, %v460
      %462 = vmatmul.f32.gmra.mxu0 %v309
      %v463 = vpop.f32.mrf.mxu0
      %v464 = vadd.f32 %v399, %v463
      %465 = vdwg.mxu0
      %466 = vst.msk [vmem:[%s240] sm:$0xff] %vm262, %v419
      %467 = vst.msk [vmem:[%s240 + $0x8] sm:$0xff] %vm262, %v422
      %468 = vst.msk [vmem:[%s240 + $0x10] sm:$0xff] %vm262, %v425
      %469 = vst.msk [vmem:[%s240 + $0x18] sm:$0xff] %vm262, %v428
      %470 = vst.msk [vmem:[%s240 + $0x20] sm:$0xff] %vm262, %v431
      %471 = vst.msk [vmem:[%s240 + $0x28] sm:$0xff] %vm262, %v434
      %472 = vst.msk [vmem:[%s240 + $0x30] sm:$0xff] %vm262, %v437
      %473 = vst.msk [vmem:[%s240 + $0x38] sm:$0xff] %vm262, %v440
      %474 = vst.msk [vmem:[%s240 + $0x40] sm:$0xff] %vm262, %v443
      %475 = vst.msk [vmem:[%s240 + $0x48] sm:$0xff] %vm262, %v446
      %476 = vst.msk [vmem:[%s240 + $0x50] sm:$0xff] %vm262, %v449
      %477 = vst.msk [vmem:[%s240 + $0x58] sm:$0xff] %vm262, %v452
      %478 = vst.msk [vmem:[%s240 + $0x60] sm:$0xff] %vm262, %v455
      %479 = vst.msk [vmem:[%s240 + $0x68] sm:$0xff] %vm262, %v458
      %480 = vst.msk [vmem:[%s240 + $0x70] sm:$0xff] %vm262, %v461
      %481 = vst.msk [vmem:[%s240 + $0x78] sm:$0xff] %vm262, %v464
      %s482 = smul.u32 16, %s17
      %p483 = scmp.lt.s32.totalorder %s482, 31
      %s484 = scalar_select %p483, %s482, 31
      %s485 = smul.addr %s484, 8
      %s486 = scalar_lea.vmem %s4, %s485
      %s487 = smul.u32 16, %s17
      %p488 = scmp.lt.s32.totalorder %s487, 31
      %s489 = scalar_select %p488, %s487, 31
      %s490 = smul.addr %s489, 8
      %s491 = scalar_lea.vmem %s5, %s490
      // Predicated region
      $region37: #{tpu_custom_call.1} parent=35 // pred_check
        %p492 = pneg %p124
      $region38: #{tpu_custom_call.1} parent=35 // pred_check_branch
        %494 = sbr.rel (%p492) target = $region40
      $region39: #{tpu_custom_call.1} parent=35 // pred_region
        %s495 = smul.u32 16, %s17
      $region40: #{tpu_custom_call.1} parent=35 // pred_fallthru
        _
      // Predicated region
      $region41: #{tpu_custom_call.1} parent=35 // pred_check
        %p496 = pneg %p150
      $region42: #{tpu_custom_call.1} parent=35 // pred_check_branch
        %498 = sbr.rel (%p496) target = $region44
      $region43: #{tpu_custom_call.1} parent=35 // pred_region
        %s499 = smul.u32 16, %s17
      $region44: #{tpu_custom_call.1} parent=35 // pred_fallthru
        _
    $region36: #{tpu_custom_call.1} parent=5 // pred_fallthru
      _
    %p500 = scmp.le.s32.totalorder 2, %s12
    // Predicated region
    $region45: #{tpu_custom_call.1} parent=5 // pred_check
      %p501 = pneg %p500
    $region46: #{tpu_custom_call.1} parent=5 // pred_check_branch
      %503 = sbr.rel (%p501) target = $region48
    $region47: #{tpu_custom_call.1} parent=5 // pred_region
      %s504 = ssub.s32 %s12, 2
      // Predicated region
      $region49: #{tpu_custom_call.1} parent=47 // pred_check
        %p505 = pneg %p130
      $region50: #{tpu_custom_call.1} parent=47 // pred_check_branch
        %507 = sbr.rel (%p505) target = $region52
      $region51: #{tpu_custom_call.1} parent=47 // pred_region
        %s508 = smul.u32 16, %s18
        %p509 = scmp.lt.s32.totalorder %s508, 31
        %s510 = scalar_select %p509, %s508, 31
        %s511 = smul.addr %s510, 8
        %s512 = scalar_lea.vmem %s4, %s511
      $region52: #{tpu_custom_call.1} parent=47 // pred_fallthru
        _
      // Predicated region
      $region53: #{tpu_custom_call.1} parent=47 // pred_check
        %p513 = pneg %p156
      $region54: #{tpu_custom_call.1} parent=47 // pred_check_branch
        %515 = sbr.rel (%p513) target = $region56
      $region55: #{tpu_custom_call.1} parent=47 // pred_region
        %s516 = smul.u32 16, %s18
        %p517 = scmp.lt.s32.totalorder %s516, 31
        %s518 = scalar_select %p517, %s516, 31
        %s519 = smul.addr %s518, 8
        %s520 = scalar_lea.vmem %s5, %s519
      $region56: #{tpu_custom_call.1} parent=47 // pred_fallthru
        _
    $region48: #{tpu_custom_call.1} parent=5 // pred_fallthru
      _
  $region6: #{tpu_custom_call.1} parent=0 // loop_footer
    %s16 = sadd.s32 1, %s12
  $region7: #{tpu_custom_call.1} parent=0 // loop_footer_branch
    %11 = sbr.rel target = $region3
  $region8: #{tpu_custom_call.1} parent=0 // loop_exit
    _

</llo_original>
